<compile_context>
chip_gen: v5e
topology: v5e:2x2
jax: 0.10.0
libtpu: 0.0.40
codegen_flags: <defaults>
</compile_context>

<pallas_src>
import jax
import jax.numpy as jnp
from jax.experimental import pallas as pl
from jax.experimental.pallas import tpu as pltpu

_LANE = 128              # lane (minor) dimension of a vreg
_MAX_BLOCK_ROWS = 1024   # 1024 x 128 f32 tile = 512 KiB per VMEM buffer


def _swish_kernel(x_ref, o_ref):
    # Load in storage dtype, compute in f32, store back in storage dtype.
    x = x_ref[...].astype(jnp.float32)
    o_ref[...] = (x / (1.0 + jnp.exp(-x))).astype(o_ref.dtype)


def _sublane_multiple(dtype):
    # Sub-32-bit dtypes pack along sublanes: the minimal second-minor tile is
    # 8 rows for 32-bit, 16 for 16-bit, 32 for 8-bit.
    itemsize = jnp.dtype(dtype).itemsize
    return 8 * max(1, 4 // itemsize)


def swish(x):
    """Elementwise x * sigmoid(x), matching `input * torch.sigmoid(input)`."""
    orig_shape = x.shape
    dtype = x.dtype
    flat = x.reshape(-1)
    n = flat.shape[0]

    sub = _sublane_multiple(dtype)
    rows_needed = pl.cdiv(n, _LANE)
    block_rows = min(_MAX_BLOCK_ROWS, pl.cdiv(rows_needed, sub) * sub)
    rows = pl.cdiv(rows_needed, block_rows) * block_rows
    n_pad = rows * _LANE
    if n_pad != n:
        flat = jnp.pad(flat, (0, n_pad - n))
    x2d = flat.reshape(rows, _LANE)

    out = pl.pallas_call(
        _swish_kernel,
        grid=(rows // block_rows,),
        in_specs=[pl.BlockSpec((block_rows, _LANE), lambda i: (i, 0))],
        out_specs=pl.BlockSpec((block_rows, _LANE), lambda i: (i, 0)),
        out_shape=jax.ShapeDtypeStruct((rows, _LANE), dtype),
        compiler_params=pltpu.CompilerParams(
            dimension_semantics=("parallel",)),
    )(x2d)

    out_flat = out.reshape(-1)
    if n_pad != n:
        out_flat = out_flat[:n]
    return out_flat.reshape(orig_shape)


if __name__ == "__main__":
    key = jax.random.PRNGKey(0)
    # Small NCHW-style input, like the PyTorch usage context.
    x = jax.random.normal(key, (2, 4, 16, 16), jnp.float32)

    fwd = jax.jit(swish)
    y = jax.block_until_ready(fwd(x))

    assert y.shape == x.shape and y.dtype == x.dtype
    ref = x * jax.nn.sigmoid(x)
    assert bool(jnp.all(jnp.isfinite(y)))
    assert bool(jnp.allclose(y, ref, atol=1e-6, rtol=1e-6))

    # bf16 path (storage dtype preserved through HBM, f32 math in-kernel).
    xb = x.astype(jnp.bfloat16)
    yb = jax.block_until_ready(fwd(xb))
    refb = (xb.astype(jnp.float32) * jax.nn.sigmoid(xb.astype(jnp.float32)))
    assert yb.dtype == jnp.bfloat16 and yb.shape == xb.shape
    assert bool(jnp.allclose(yb.astype(jnp.float32), refb, atol=2e-2, rtol=2e-2))

    print("KERNEL_OK")
</pallas_src>

<mosaic_0001>
module attributes {stable_mosaic.version = 11 : i64} {
  func.func @_swish_kernel(%arg0: i32, %arg1: memref<16x128xf32, #tpu.memory_space<vmem>>, %arg2: memref<16x128xf32, #tpu.memory_space<vmem>>) attributes {dimension_semantics = [#tpu.dimension_semantics<parallel>], iteration_bounds = array<i64: 1>, scalar_prefetch = 0 : i64, scratch_operands = 0 : i64, tpu.core_type = #tpu.core_type<tc>, window_params = [{transform_indices = @transform_0, window_bounds = array<i64: 16, 128>}, {transform_indices = @transform_1, window_bounds = array<i64: 16, 128>}]} {
    %c0 = arith.constant 0 : index
    %c0_0 = arith.constant 0 : index
    %0 = vector.load %arg1[%c0, %c0_0] : memref<16x128xf32, #tpu.memory_space<vmem>>, vector<16x128xf32>
    %cst = arith.constant 0.000000e+00 : f32
    %1 = vector.broadcast %cst : f32 to vector<16x128xf32>
    %2 = arith.subf %1, %0 : vector<16x128xf32>
    %3 = math.exp %2 : vector<16x128xf32>
    %cst_1 = arith.constant 1.000000e+00 : f32
    %4 = vector.broadcast %cst_1 : f32 to vector<16x128xf32>
    %5 = arith.addf %4, %3 : vector<16x128xf32>
    %6 = arith.divf %0, %5 : vector<16x128xf32>
    %c0_2 = arith.constant 0 : index
    %c0_3 = arith.constant 0 : index
    %7 = vector.load %arg2[%c0_2, %c0_3] : memref<16x128xf32, #tpu.memory_space<vmem>>, vector<16x128xf32>
    tpu.vector_store %arg2[%c0_2, %c0_3], %6 {strides = array<i32>} : memref<16x128xf32, #tpu.memory_space<vmem>>, vector<16x128xf32>,
    return
  }
  func.func @transform_0(%arg0: i32) -> (i32, i32) {
    %c0_i32 = arith.constant 0 : i32
    %c0_i32_0 = arith.constant 0 : i32
    return %arg0, %c0_i32 : i32, i32
  }
  func.func @transform_1(%arg0: i32) -> (i32, i32) {
    %c0_i32 = arith.constant 0 : i32
    %c0_i32_0 = arith.constant 0 : i32
    return %arg0, %c0_i32 : i32, i32
  }
}

</mosaic_0001>

<llo_original>
// kernel: swish.1
$region0: #{swish.1}
  #allocation0 [shape = 'u32[]', space=smem, size = 0x4, offset = 0x4, fixed_abs, tag = 'smem constant byte address 0x4 - core index']
  #allocation1 [shape = 'u32[72,128]{1,0:T(1,128)}', space=vmem, size = 0x9000, scoped, tag = 'internal scratch']
  %s0 = inlined_call_operand.vmem [shape: f32[16,128], index: 0, kind: input, shape index: {}]
  %s1 = inlined_call_operand.vmem [shape: f32[16,128], index: 1, kind: output, shape index: {}]
  %s2 = sld [smem:[#allocation0]]
  $region14: #{swish.1} parent=0
    _
  %s4 = ssub.s32 1, %s2
  %s5 = scalar_select 0, %s4, %s2
  // Predicated region
  $region2: #{swish.1} parent=0 // pred_check
    _
  $region3: #{swish.1} parent=0 // pred_check_branch
    %7 = sbr.rel (0) target = $region5
  $region4: #{swish.1} parent=0 // pred_region
    _
  $region5: #{swish.1} parent=0 // pred_fallthru
    _
  %v8 = vld [vmem:[%s0] sm:$0xff]
  %v9 = vld [vmem:[%s0 + $0x8] sm:$0xff]
  %v10 = vsub.f32 0.0, %v8
  %v11 = vsub.f32 0.0, %v9
  %v12 = vmul.f32 %v10, 1.442695
  %v13 = vpow.pop %v12
  %v14 = vmul.f32 %v11, 1.442695
  %v15 = vpow.pop %v14
  %v16 = vadd.f32 %v13, 1.0
  %v17 = vadd.f32 %v15, 1.0
  %v18 = vrcp.pop %v16
  %v19 = vmul.f32 %v16, %v18
  %v20 = vsub.f32 1.0, %v19
  %v21 = vmul.f32 %v18, %v20
  %v22 = vadd.f32 %v18, %v21
  %vm23 = vweird.f32 %v16
  %vm24 = vweird.f32 %v18
  %vm25 = vmor %vm23, %vm24
  %v26 = vsel %vm25, %v18, %v22
  %v27 = vand.u32 2147483647, %v16
  %vm28 = vcmp.eq.f32.partialorder %v27, 8.507059e+37
  %v29 = vand.u32 %v16, 2147483648
  %v30 = vor.u32 1.1754944e-38, %v29
  %v31 = vsel %vm28, %v30, %v26
  %v32 = vmul.f32 %v8, %v31
  %v33 = vrcp.pop %v17
  %v34 = vmul.f32 %v17, %v33
  %v35 = vsub.f32 1.0, %v34
  %v36 = vmul.f32 %v33, %v35
  %v37 = vadd.f32 %v33, %v36
  %vm38 = vweird.f32 %v17
  %vm39 = vweird.f32 %v33
  %vm40 = vmor %vm38, %vm39
  %v41 = vsel %vm40, %v33, %v37
  %v42 = vand.u32 2147483647, %v17
  %vm43 = vcmp.eq.f32.partialorder %v42, 8.507059e+37
  %v44 = vand.u32 %v17, 2147483648
  %v45 = vor.u32 1.1754944e-38, %v44
  %v46 = vsel %vm43, %v45, %v41
  %v47 = vmul.f32 %v9, %v46
  %48 = vst [vmem:[%s1] sm:$0xff] %v32
  %49 = vst [vmem:[%s1 + $0x8] sm:$0xff] %v47
  // Predicated region
  $region6: #{swish.1} parent=0 // pred_check
    _
  $region7: #{swish.1} parent=0 // pred_check_branch
    %51 = sbr.rel (0) target = $region9
  $region8: #{swish.1} parent=0 // pred_region
    _
  $region9: #{swish.1} parent=0 // pred_fallthru
    _
  // Predicated region
  $region10: #{swish.1} parent=0 // pred_check
    _
  $region11: #{swish.1} parent=0 // pred_check_branch
    %53 = sbr.rel (0) target = $region13
  $region12: #{swish.1} parent=0 // pred_region
    _
  $region13: #{swish.1} parent=0 // pred_fallthru
    _

</llo_original>
